<compile_context>
chip_gen: v6e
topology: v6e:2x2x1
jax: 0.10.0
libtpu: 0.0.40
codegen_flags: <defaults>
</compile_context>

<pallas_src>
import functools

import jax
import jax.numpy as jnp
from jax.experimental import pallas as pl
from jax.experimental.pallas import tpu as pltpu

IN_DIM, HID_DIM, OUT_DIM = 2, 8, 2
DEFAULT_BATCH_TILE = 512 * 1024  # lanes per grid step; multiple of 1024


def _cdiv(a, b):
    return -(-a // b)


def _round_up(a, b):
    return _cdiv(a, b) * b


def _tinynet_kernel(p_ref, x_ref, o_ref, *, activation):
    # p_ref: SMEM f32[42] packed params:
    #   [2j], [2j+1] = W1[j, 0], W1[j, 1]   (torch layout [HID, IN])
    #   [16 + j]     = b1[j]
    #   [24 + j]     = W2[0, j]; [32 + j] = W2[1, j]   (torch layout [OUT, HID])
    #   [40], [41]   = b2[0], b2[1]
    # x_ref: VMEM [IN,  R, 128]   (batch on sublane+lane axes)
    # o_ref: VMEM [OUT, R, 128]
    x0 = x_ref[0]                              # [R, 128]
    x1 = x_ref[1]                              # [R, 128]
    acc0 = jnp.zeros_like(x0)
    acc1 = jnp.zeros_like(x0)

    for j in range(HID_DIM):                   # fully unrolled: 8 scalar-weighted FMAs
        h = p_ref[2 * j] * x0 + p_ref[2 * j + 1] * x1 + p_ref[16 + j]
        if activation == "sigmoid":
            h = jax.nn.sigmoid(h)
        elif activation == "tanh":
            h = jnp.tanh(h)
        elif activation == "relu":
            h = jnp.maximum(h, 0.0)
        elif activation == "leakyrelu":
            h = jnp.where(h >= 0.0, h, 0.05 * h)   # spec: negative_slope=0.05
        else:
            raise ValueError("Unknown activation")
        acc0 = acc0 + p_ref[24 + j] * h        # fc2 reduce: plain VPU adds (no XLU)
        acc1 = acc1 + p_ref[32 + j] * h

    o_ref[0] = acc0 + p_ref[40]                # two row stores; no concat/shuffle
    o_ref[1] = acc1 + p_ref[41]


def _tinynet_forward_impl(x, w1, b1, w2, b2, activation, batch_tile):
    """x: [B, 2]; weights in PyTorch nn.Linear layout:
       w1: [8, 2], b1: [8], w2: [2, 8], b2: [2]. Returns [B, 2] float32."""
    B = x.shape[0]
    assert x.shape[1] == IN_DIM
    assert batch_tile % 1024 == 0, "batch_tile must be a multiple of 1024"

    # Tile selection: pad batch to a multiple of 1024 (so tile//128 is a multiple
    # of 8 -> no sublane padding), prefer >=2 grid steps (both TCs on v7x).
    b_pad = _round_up(B, 1024)
    n_steps = _cdiv(b_pad, batch_tile)
    if n_steps == 1 and b_pad >= 2048:
        n_steps = 2
    tile = _round_up(_cdiv(b_pad, n_steps), 1024)
    b_pad = n_steps * tile
    r_tile = tile // 128
    r_total = b_pad // 128

    # One tiny packed SMEM operand with all weights and biases.
    params = jnp.concatenate(
        [w1.reshape(-1), b1.reshape(-1), w2.reshape(-1), b2.reshape(-1)]
    ).astype(jnp.float32)

    # Layout transform (fused under the surrounding jit): [B,2] -> [2, R, 128].
    xt = x.astype(jnp.float32).T                             # [IN, B]
    if b_pad != B:
        xt = jnp.pad(xt, ((0, 0), (0, b_pad - B)))
    x3 = xt.reshape(IN_DIM, r_total, 128)

    # Explicit VMEM budget: double-buffered in+out blocks (+headroom), v7x-safe cap.
    block_bytes = (IN_DIM + OUT_DIM) * tile * 4
    vmem_limit = int(min(2 * block_bytes + (2 << 20), 48 << 20))

    flops = 2 * B * (IN_DIM * HID_DIM + HID_DIM * OUT_DIM)
    transcendentals = B * HID_DIM if activation in ("sigmoid", "tanh") else 0
    bytes_accessed = 4 * (b_pad * (IN_DIM + OUT_DIM) + params.size)

    kernel = functools.partial(_tinynet_kernel, activation=activation)
    out3 = pl.pallas_call(
        kernel,
        out_shape=jax.ShapeDtypeStruct((OUT_DIM, r_total, 128), jnp.float32),
        grid_spec=pl.GridSpec(
            grid=(n_steps,),
            in_specs=[
                pl.BlockSpec(memory_space=pltpu.MemorySpace.SMEM),      # params
                pl.BlockSpec((IN_DIM, r_tile, 128), lambda i: (0, i, 0)),  # x
            ],
            out_specs=pl.BlockSpec((OUT_DIM, r_tile, 128), lambda i: (0, i, 0)),
        ),
        compiler_params=pltpu.CompilerParams(
            dimension_semantics=("parallel",),       # v7x: 2 TCs share the batch
            vmem_limit_bytes=vmem_limit),
        cost_estimate=pl.CostEstimate(
            flops=flops,
            transcendentals=transcendentals,
            bytes_accessed=bytes_accessed),
    )(params, x3)

    return out3.reshape(OUT_DIM, b_pad)[:, :B].T


_jit_forward = jax.jit(_tinynet_forward_impl, static_argnums=(5, 6))


def tinynet_forward(x, w1, b1, w2, b2, *, activation="tanh",
                    batch_tile=DEFAULT_BATCH_TILE):
    return _jit_forward(x, w1, b1, w2, b2, activation, batch_tile)


def _init_params(key):
    # nn.Linear-style uniform(-1/sqrt(fan_in), 1/sqrt(fan_in)), PyTorch layout.
    k1, k2, k3, k4 = jax.random.split(key, 4)
    bound1 = 1.0 / jnp.sqrt(IN_DIM)
    bound2 = 1.0 / jnp.sqrt(HID_DIM)
    w1 = jax.random.uniform(k1, (HID_DIM, IN_DIM), jnp.float32, -bound1, bound1)
    b1 = jax.random.uniform(k2, (HID_DIM,), jnp.float32, -bound1, bound1)
    w2 = jax.random.uniform(k3, (OUT_DIM, HID_DIM), jnp.float32, -bound2, bound2)
    b2 = jax.random.uniform(k4, (OUT_DIM,), jnp.float32, -bound2, bound2)
    return w1, b1, w2, b2


def _reference(x, w1, b1, w2, b2, activation):
    pre = x @ w1.T + b1
    if activation == "sigmoid":
        h = jax.nn.sigmoid(pre)
    elif activation == "tanh":
        h = jnp.tanh(pre)
    elif activation == "relu":
        h = jnp.maximum(pre, 0.0)
    elif activation == "leakyrelu":
        h = jnp.where(pre >= 0.0, pre, 0.05 * pre)
    else:
        raise ValueError("Unknown activation")
    return h @ w2.T + b2


if __name__ == "__main__":
    key = jax.random.PRNGKey(0)
    kx, kp = jax.random.split(key)

    batch = 8
    x = jax.random.normal(kx, (batch, IN_DIM), jnp.float32)
    w1, b1, w2, b2 = _init_params(kp)

    ok = True
    for activation in ("sigmoid", "tanh", "relu", "leakyrelu"):
        out = tinynet_forward(x, w1, b1, w2, b2, activation=activation)
        out = jax.block_until_ready(out)
        ref = _reference(x, w1, b1, w2, b2, activation)
        assert out.shape == (batch, OUT_DIM)
        ok &= bool(jnp.allclose(out, ref, atol=1e-5, rtol=1e-5))
    assert ok

    print("KERNEL_OK")
</pallas_src>

<mosaic_0001>
module attributes {stable_mosaic.version = 11 : i64} {
  func.func @_tinynet_kernel(%arg0: i32, %arg1: memref<42xf32, #tpu.memory_space<smem>>, %arg2: memref<2x8x128xf32, #tpu.memory_space<vmem>>, %arg3: memref<2x8x128xf32, #tpu.memory_space<vmem>>) attributes {dimension_semantics = [#tpu.dimension_semantics<parallel>], iteration_bounds = array<i64: 1>, scalar_prefetch = 0 : i64, scratch_operands = 0 : i64, tpu.core_type = #tpu.core_type<tc>, window_params = [{transform_indices = @transform_0, window_bounds = array<i64: 42>}, {transform_indices = @transform_1, window_bounds = array<i64: 2, 8, 128>}, {transform_indices = @transform_2, window_bounds = array<i64: 2, 8, 128>}]} {
    %c0 = arith.constant 0 : index
    %c0_0 = arith.constant 0 : index
    %c0_1 = arith.constant 0 : index
    %0 = vector.load %arg2[%c0, %c0_0, %c0_1] : memref<2x8x128xf32, #tpu.memory_space<vmem>>, vector<1x8x128xf32>
    %1 = vector.shape_cast %0 : vector<1x8x128xf32> to vector<8x128xf32>
    %c1 = arith.constant 1 : index
    %c0_2 = arith.constant 0 : index
    %c0_3 = arith.constant 0 : index
    %2 = vector.load %arg2[%c1, %c0_2, %c0_3] : memref<2x8x128xf32, #tpu.memory_space<vmem>>, vector<1x8x128xf32>
    %3 = vector.shape_cast %2 : vector<1x8x128xf32> to vector<8x128xf32>
    %cst = arith.constant 0.000000e+00 : f32
    %4 = vector.broadcast %cst : f32 to vector<8x128xf32>
    %cst_4 = arith.constant 0.000000e+00 : f32
    %5 = vector.broadcast %cst_4 : f32 to vector<8x128xf32>
    %c0_5 = arith.constant 0 : index
    %6 = memref.load %arg1[%c0_5] : memref<42xf32, #tpu.memory_space<smem>>
    %7 = vector.broadcast %6 : f32 to vector<8x128xf32>
    %8 = arith.mulf %7, %1 : vector<8x128xf32>
    %c1_6 = arith.constant 1 : index
    %9 = memref.load %arg1[%c1_6] : memref<42xf32, #tpu.memory_space<smem>>
    %10 = vector.broadcast %9 : f32 to vector<8x128xf32>
    %11 = arith.mulf %10, %3 : vector<8x128xf32>
    %12 = arith.addf %8, %11 : vector<8x128xf32>
    %c16 = arith.constant 16 : index
    %13 = memref.load %arg1[%c16] : memref<42xf32, #tpu.memory_space<smem>>
    %14 = vector.broadcast %13 : f32 to vector<8x128xf32>
    %15 = arith.addf %12, %14 : vector<8x128xf32>
    %16 = arith.negf %15 : vector<8x128xf32>
    %17 = math.exp %16 : vector<8x128xf32>
    %cst_7 = arith.constant 1.000000e+00 : f32
    %18 = vector.broadcast %cst_7 : f32 to vector<8x128xf32>
    %19 = arith.addf %18, %17 : vector<8x128xf32>
    %20 = arith.divf %18, %19 : vector<8x128xf32>
    %c24 = arith.constant 24 : index
    %21 = memref.load %arg1[%c24] : memref<42xf32, #tpu.memory_space<smem>>
    %22 = vector.broadcast %21 : f32 to vector<8x128xf32>
    %23 = arith.mulf %22, %20 : vector<8x128xf32>
    %24 = arith.addf %4, %23 : vector<8x128xf32>
    %c32 = arith.constant 32 : index
    %25 = memref.load %arg1[%c32] : memref<42xf32, #tpu.memory_space<smem>>
    %26 = vector.broadcast %25 : f32 to vector<8x128xf32>
    %27 = arith.mulf %26, %20 : vector<8x128xf32>
    %28 = arith.addf %5, %27 : vector<8x128xf32>
    %c2 = arith.constant 2 : index
    %29 = memref.load %arg1[%c2] : memref<42xf32, #tpu.memory_space<smem>>
    %30 = vector.broadcast %29 : f32 to vector<8x128xf32>
    %31 = arith.mulf %30, %1 : vector<8x128xf32>
    %c3 = arith.constant 3 : index
    %32 = memref.load %arg1[%c3] : memref<42xf32, #tpu.memory_space<smem>>
    %33 = vector.broadcast %32 : f32 to vector<8x128xf32>
    %34 = arith.mulf %33, %3 : vector<8x128xf32>
    %35 = arith.addf %31, %34 : vector<8x128xf32>
    %c17 = arith.constant 17 : index
    %36 = memref.load %arg1[%c17] : memref<42xf32, #tpu.memory_space<smem>>
    %37 = vector.broadcast %36 : f32 to vector<8x128xf32>
    %38 = arith.addf %35, %37 : vector<8x128xf32>
    %39 = arith.negf %38 : vector<8x128xf32>
    %40 = math.exp %39 : vector<8x128xf32>
    %cst_8 = arith.constant 1.000000e+00 : f32
    %41 = vector.broadcast %cst_8 : f32 to vector<8x128xf32>
    %42 = arith.addf %41, %40 : vector<8x128xf32>
    %43 = arith.divf %41, %42 : vector<8x128xf32>
    %c25 = arith.constant 25 : index
    %44 = memref.load %arg1[%c25] : memref<42xf32, #tpu.memory_space<smem>>
    %45 = vector.broadcast %44 : f32 to vector<8x128xf32>
    %46 = arith.mulf %45, %43 : vector<8x128xf32>
    %47 = arith.addf %24, %46 : vector<8x128xf32>
    %c33 = arith.constant 33 : index
    %48 = memref.load %arg1[%c33] : memref<42xf32, #tpu.memory_space<smem>>
    %49 = vector.broadcast %48 : f32 to vector<8x128xf32>
    %50 = arith.mulf %49, %43 : vector<8x128xf32>
    %51 = arith.addf %28, %50 : vector<8x128xf32>
    %c4 = arith.constant 4 : index
    %52 = memref.load %arg1[%c4] : memref<42xf32, #tpu.memory_space<smem>>
    %53 = vector.broadcast %52 : f32 to vector<8x128xf32>
    %54 = arith.mulf %53, %1 : vector<8x128xf32>
    %c5 = arith.constant 5 : index
    %55 = memref.load %arg1[%c5] : memref<42xf32, #tpu.memory_space<smem>>
    %56 = vector.broadcast %55 : f32 to vector<8x128xf32>
    %57 = arith.mulf %56, %3 : vector<8x128xf32>
    %58 = arith.addf %54, %57 : vector<8x128xf32>
    %c18 = arith.constant 18 : index
    %59 = memref.load %arg1[%c18] : memref<42xf32, #tpu.memory_space<smem>>
    %60 = vector.broadcast %59 : f32 to vector<8x128xf32>
    %61 = arith.addf %58, %60 : vector<8x128xf32>
    %62 = arith.negf %61 : vector<8x128xf32>
    %63 = math.exp %62 : vector<8x128xf32>
    %cst_9 = arith.constant 1.000000e+00 : f32
    %64 = vector.broadcast %cst_9 : f32 to vector<8x128xf32>
    %65 = arith.addf %64, %63 : vector<8x128xf32>
    %66 = arith.divf %64, %65 : vector<8x128xf32>
    %c26 = arith.constant 26 : index
    %67 = memref.load %arg1[%c26] : memref<42xf32, #tpu.memory_space<smem>>
    %68 = vector.broadcast %67 : f32 to vector<8x128xf32>
    %69 = arith.mulf %68, %66 : vector<8x128xf32>
    %70 = arith.addf %47, %69 : vector<8x128xf32>
    %c34 = arith.constant 34 : index
    %71 = memref.load %arg1[%c34] : memref<42xf32, #tpu.memory_space<smem>>
    %72 = vector.broadcast %71 : f32 to vector<8x128xf32>
    %73 = arith.mulf %72, %66 : vector<8x128xf32>
    %74 = arith.addf %51, %73 : vector<8x128xf32>
    %c6 = arith.constant 6 : index
    %75 = memref.load %arg1[%c6] : memref<42xf32, #tpu.memory_space<smem>>
    %76 = vector.broadcast %75 : f32 to vector<8x128xf32>
    %77 = arith.mulf %76, %1 : vector<8x128xf32>
    %c7 = arith.constant 7 : index
    %78 = memref.load %arg1[%c7] : memref<42xf32, #tpu.memory_space<smem>>
    %79 = vector.broadcast %78 : f32 to vector<8x128xf32>
    %80 = arith.mulf %79, %3 : vector<8x128xf32>
    %81 = arith.addf %77, %80 : vector<8x128xf32>
    %c19 = arith.constant 19 : index
    %82 = memref.load %arg1[%c19] : memref<42xf32, #tpu.memory_space<smem>>
    %83 = vector.broadcast %82 : f32 to vector<8x128xf32>
    %84 = arith.addf %81, %83 : vector<8x128xf32>
    %85 = arith.negf %84 : vector<8x128xf32>
    %86 = math.exp %85 : vector<8x128xf32>
    %cst_10 = arith.constant 1.000000e+00 : f32
    %87 = vector.broadcast %cst_10 : f32 to vector<8x128xf32>
    %88 = arith.addf %87, %86 : vector<8x128xf32>
    %89 = arith.divf %87, %88 : vector<8x128xf32>
    %c27 = arith.constant 27 : index
    %90 = memref.load %arg1[%c27] : memref<42xf32, #tpu.memory_space<smem>>
    %91 = vector.broadcast %90 : f32 to vector<8x128xf32>
    %92 = arith.mulf %91, %89 : vector<8x128xf32>
    %93 = arith.addf %70, %92 : vector<8x128xf32>
    %c35 = arith.constant 35 : index
    %94 = memref.load %arg1[%c35] : memref<42xf32, #tpu.memory_space<smem>>
    %95 = vector.broadcast %94 : f32 to vector<8x128xf32>
    %96 = arith.mulf %95, %89 : vector<8x128xf32>
    %97 = arith.addf %74, %96 : vector<8x128xf32>
    %c8 = arith.constant 8 : index
    %98 = memref.load %arg1[%c8] : memref<42xf32, #tpu.memory_space<smem>>
    %99 = vector.broadcast %98 : f32 to vector<8x128xf32>
    %100 = arith.mulf %99, %1 : vector<8x128xf32>
    %c9 = arith.constant 9 : index
    %101 = memref.load %arg1[%c9] : memref<42xf32, #tpu.memory_space<smem>>
    %102 = vector.broadcast %101 : f32 to vector<8x128xf32>
    %103 = arith.mulf %102, %3 : vector<8x128xf32>
    %104 = arith.addf %100, %103 : vector<8x128xf32>
    %c20 = arith.constant 20 : index
    %105 = memref.load %arg1[%c20] : memref<42xf32, #tpu.memory_space<smem>>
    %106 = vector.broadcast %105 : f32 to vector<8x128xf32>
    %107 = arith.addf %104, %106 : vector<8x128xf32>
    %108 = arith.negf %107 : vector<8x128xf32>
    %109 = math.exp %108 : vector<8x128xf32>
    %cst_11 = arith.constant 1.000000e+00 : f32
    %110 = vector.broadcast %cst_11 : f32 to vector<8x128xf32>
    %111 = arith.addf %110, %109 : vector<8x128xf32>
    %112 = arith.divf %110, %111 : vector<8x128xf32>
    %c28 = arith.constant 28 : index
    %113 = memref.load %arg1[%c28] : memref<42xf32, #tpu.memory_space<smem>>
    %114 = vector.broadcast %113 : f32 to vector<8x128xf32>
    %115 = arith.mulf %114, %112 : vector<8x128xf32>
    %116 = arith.addf %93, %115 : vector<8x128xf32>
    %c36 = arith.constant 36 : index
    %117 = memref.load %arg1[%c36] : memref<42xf32, #tpu.memory_space<smem>>
    %118 = vector.broadcast %117 : f32 to vector<8x128xf32>
    %119 = arith.mulf %118, %112 : vector<8x128xf32>
    %120 = arith.addf %97, %119 : vector<8x128xf32>
    %c10 = arith.constant 10 : index
    %121 = memref.load %arg1[%c10] : memref<42xf32, #tpu.memory_space<smem>>
    %122 = vector.broadcast %121 : f32 to vector<8x128xf32>
    %123 = arith.mulf %122, %1 : vector<8x128xf32>
    %c11 = arith.constant 11 : index
    %124 = memref.load %arg1[%c11] : memref<42xf32, #tpu.memory_space<smem>>
    %125 = vector.broadcast %124 : f32 to vector<8x128xf32>
    %126 = arith.mulf %125, %3 : vector<8x128xf32>
    %127 = arith.addf %123, %126 : vector<8x128xf32>
    %c21 = arith.constant 21 : index
    %128 = memref.load %arg1[%c21] : memref<42xf32, #tpu.memory_space<smem>>
    %129 = vector.broadcast %128 : f32 to vector<8x128xf32>
    %130 = arith.addf %127, %129 : vector<8x128xf32>
    %131 = arith.negf %130 : vector<8x128xf32>
    %132 = math.exp %131 : vector<8x128xf32>
    %cst_12 = arith.constant 1.000000e+00 : f32
    %133 = vector.broadcast %cst_12 : f32 to vector<8x128xf32>
    %134 = arith.addf %133, %132 : vector<8x128xf32>
    %135 = arith.divf %133, %134 : vector<8x128xf32>
    %c29 = arith.constant 29 : index
    %136 = memref.load %arg1[%c29] : memref<42xf32, #tpu.memory_space<smem>>
    %137 = vector.broadcast %136 : f32 to vector<8x128xf32>
    %138 = arith.mulf %137, %135 : vector<8x128xf32>
    %139 = arith.addf %116, %138 : vector<8x128xf32>
    %c37 = arith.constant 37 : index
    %140 = memref.load %arg1[%c37] : memref<42xf32, #tpu.memory_space<smem>>
    %141 = vector.broadcast %140 : f32 to vector<8x128xf32>
    %142 = arith.mulf %141, %135 : vector<8x128xf32>
    %143 = arith.addf %120, %142 : vector<8x128xf32>
    %c12 = arith.constant 12 : index
    %144 = memref.load %arg1[%c12] : memref<42xf32, #tpu.memory_space<smem>>
    %145 = vector.broadcast %144 : f32 to vector<8x128xf32>
    %146 = arith.mulf %145, %1 : vector<8x128xf32>
    %c13 = arith.constant 13 : index
    %147 = memref.load %arg1[%c13] : memref<42xf32, #tpu.memory_space<smem>>
    %148 = vector.broadcast %147 : f32 to vector<8x128xf32>
    %149 = arith.mulf %148, %3 : vector<8x128xf32>
    %150 = arith.addf %146, %149 : vector<8x128xf32>
    %c22 = arith.constant 22 : index
    %151 = memref.load %arg1[%c22] : memref<42xf32, #tpu.memory_space<smem>>
    %152 = vector.broadcast %151 : f32 to vector<8x128xf32>
    %153 = arith.addf %150, %152 : vector<8x128xf32>
    %154 = arith.negf %153 : vector<8x128xf32>
    %155 = math.exp %154 : vector<8x128xf32>
    %cst_13 = arith.constant 1.000000e+00 : f32
    %156 = vector.broadcast %cst_13 : f32 to vector<8x128xf32>
    %157 = arith.addf %156, %155 : vector<8x128xf32>
    %158 = arith.divf %156, %157 : vector<8x128xf32>
    %c30 = arith.constant 30 : index
    %159 = memref.load %arg1[%c30] : memref<42xf32, #tpu.memory_space<smem>>
    %160 = vector.broadcast %159 : f32 to vector<8x128xf32>
    %161 = arith.mulf %160, %158 : vector<8x128xf32>
    %162 = arith.addf %139, %161 : vector<8x128xf32>
    %c38 = arith.constant 38 : index
    %163 = memref.load %arg1[%c38] : memref<42xf32, #tpu.memory_space<smem>>
    %164 = vector.broadcast %163 : f32 to vector<8x128xf32>
    %165 = arith.mulf %164, %158 : vector<8x128xf32>
    %166 = arith.addf %143, %165 : vector<8x128xf32>
    %c14 = arith.constant 14 : index
    %167 = memref.load %arg1[%c14] : memref<42xf32, #tpu.memory_space<smem>>
    %168 = vector.broadcast %167 : f32 to vector<8x128xf32>
    %169 = arith.mulf %168, %1 : vector<8x128xf32>
    %c15 = arith.constant 15 : index
    %170 = memref.load %arg1[%c15] : memref<42xf32, #tpu.memory_space<smem>>
    %171 = vector.broadcast %170 : f32 to vector<8x128xf32>
    %172 = arith.mulf %171, %3 : vector<8x128xf32>
    %173 = arith.addf %169, %172 : vector<8x128xf32>
    %c23 = arith.constant 23 : index
    %174 = memref.load %arg1[%c23] : memref<42xf32, #tpu.memory_space<smem>>
    %175 = vector.broadcast %174 : f32 to vector<8x128xf32>
    %176 = arith.addf %173, %175 : vector<8x128xf32>
    %177 = arith.negf %176 : vector<8x128xf32>
    %178 = math.exp %177 : vector<8x128xf32>
    %cst_14 = arith.constant 1.000000e+00 : f32
    %179 = vector.broadcast %cst_14 : f32 to vector<8x128xf32>
    %180 = arith.addf %179, %178 : vector<8x128xf32>
    %181 = arith.divf %179, %180 : vector<8x128xf32>
    %c31 = arith.constant 31 : index
    %182 = memref.load %arg1[%c31] : memref<42xf32, #tpu.memory_space<smem>>
    %183 = vector.broadcast %182 : f32 to vector<8x128xf32>
    %184 = arith.mulf %183, %181 : vector<8x128xf32>
    %185 = arith.addf %162, %184 : vector<8x128xf32>
    %c39 = arith.constant 39 : index
    %186 = memref.load %arg1[%c39] : memref<42xf32, #tpu.memory_space<smem>>
    %187 = vector.broadcast %186 : f32 to vector<8x128xf32>
    %188 = arith.mulf %187, %181 : vector<8x128xf32>
    %189 = arith.addf %166, %188 : vector<8x128xf32>
    %c40 = arith.constant 40 : index
    %190 = memref.load %arg1[%c40] : memref<42xf32, #tpu.memory_space<smem>>
    %191 = vector.broadcast %190 : f32 to vector<8x128xf32>
    %192 = arith.addf %185, %191 : vector<8x128xf32>
    %c0_15 = arith.constant 0 : index
    %c0_16 = arith.constant 0 : index
    %c0_17 = arith.constant 0 : index
    %193 = vector.load %arg3[%c0_15, %c0_16, %c0_17] : memref<2x8x128xf32, #tpu.memory_space<vmem>>, vector<1x8x128xf32>
    %194 = vector.shape_cast %193 : vector<1x8x128xf32> to vector<8x128xf32>
    %195 = vector.shape_cast %192 : vector<8x128xf32> to vector<1x8x128xf32>
    tpu.vector_store %arg3[%c0_15, %c0_16, %c0_17], %195 {strides = array<i32>} : memref<2x8x128xf32, #tpu.memory_space<vmem>>, vector<1x8x128xf32>,
    %c41 = arith.constant 41 : index
    %196 = memref.load %arg1[%c41] : memref<42xf32, #tpu.memory_space<smem>>
    %197 = vector.broadcast %196 : f32 to vector<8x128xf32>
    %198 = arith.addf %189, %197 : vector<8x128xf32>
    %c1_18 = arith.constant 1 : index
    %c0_19 = arith.constant 0 : index
    %c0_20 = arith.constant 0 : index
    %199 = vector.load %arg3[%c1_18, %c0_19, %c0_20] : memref<2x8x128xf32, #tpu.memory_space<vmem>>, vector<1x8x128xf32>
    %200 = vector.shape_cast %199 : vector<1x8x128xf32> to vector<8x128xf32>
    %201 = vector.shape_cast %198 : vector<8x128xf32> to vector<1x8x128xf32>
    tpu.vector_store %arg3[%c1_18, %c0_19, %c0_20], %201 {strides = array<i32>} : memref<2x8x128xf32, #tpu.memory_space<vmem>>, vector<1x8x128xf32>,
    return
  }
  func.func @transform_0(%arg0: i32) -> i32 {
    %c0_i32 = arith.constant 0 : i32
    %c0_i32_0 = arith.constant 0 : i32
    return %c0_i32 : i32
  }
  func.func @transform_1(%arg0: i32) -> (i32, i32, i32) {
    %c0_i32 = arith.constant 0 : i32
    %c0_i32_0 = arith.constant 0 : i32
    %c0_i32_1 = arith.constant 0 : i32
    return %c0_i32, %arg0, %c0_i32_0 : i32, i32, i32
  }
  func.func @transform_2(%arg0: i32) -> (i32, i32, i32) {
    %c0_i32 = arith.constant 0 : i32
    %c0_i32_0 = arith.constant 0 : i32
    %c0_i32_1 = arith.constant 0 : i32
    return %c0_i32, %arg0, %c0_i32_0 : i32, i32, i32
  }
}

</mosaic_0001>

<llo_original>
// kernel: _tinynet_forward_impl.1
$region0: #{_tinynet_forward_impl.1}
  #allocation0 [shape = 'u32[]', space=smem, size = 0x4, offset = 0x4, fixed_abs, tag = 'smem constant byte address 0x4 - core index']
  #allocation1 [shape = 'u32[144,128]{1,0:T(1,128)}', space=vmem, size = 0x12000, scoped, tag = 'internal scratch']
  %s0 = inlined_call_operand.vmem [shape: f32[42], index: 0, kind: input, shape index: {}]
  %s1 = inlined_call_operand.vmem [shape: f32[2,8,128], index: 1, kind: input, shape index: {}]
  %s2 = inlined_call_operand.vmem [shape: f32[2,8,128], index: 2, kind: output, shape index: {}]
  %s3 = sld [smem:[#allocation0]]
  $region22: #{_tinynet_forward_impl.1} parent=0
    _
  %s5 = ssub.s32 1, %s3
  %s6 = scalar_select 0, %s5, %s3
  $region1: #{_tinynet_forward_impl.1} parent=0
    #allocation2 [shape = 'u8[512]{0}', space=smem, size = 0x200, scoped, tag = 'input window, operand 0, single buffered']
    #allocation3 [shape = 's32[1]{0}', space=sflag, size = 0x4, scoped, tag = 'scoped memory for _tinynet_forward_impl.1']
    %7 = vsyncpa [#allocation3], 0
    // Predicated region
    $region2: #{_tinynet_forward_impl.1} parent=1 // pred_check
      _
    $region3: #{_tinynet_forward_impl.1} parent=1 // pred_check_branch
      %9 = sbr.rel (0) target = $region5
    $region4: #{_tinynet_forward_impl.1} parent=1 // pred_region
      %s11 = ssub.s32 16, 16
      %12 = vsyncadd [#allocation3], %s11
      %s14 = sshll.u32 %s0, 4
      %s15 = int_to_ptr.vmem [resolvable:$true] %s14
      %17 = dma.vmem_to_smem %s15, 16, [#allocation2], [#allocation3]
    $region5: #{_tinynet_forward_impl.1} parent=1 // pred_fallthru
      _
    // Predicated region
    $region6: #{_tinynet_forward_impl.1} parent=1 // pred_check
      _
    $region7: #{_tinynet_forward_impl.1} parent=1 // pred_check_branch
      %19 = sbr.rel (0) target = $region9
    $region8: #{_tinynet_forward_impl.1} parent=1 // pred_region
      _
    $region9: #{_tinynet_forward_impl.1} parent=1 // pred_fallthru
      _
    // Predicated region
    $region10: #{_tinynet_forward_impl.1} parent=1 // pred_check
      _
    $region11: #{_tinynet_forward_impl.1} parent=1 // pred_check_branch
      %21 = sbr.rel (0) target = $region13
    $region12: #{_tinynet_forward_impl.1} parent=1 // pred_region
      %22 = dma.done [#allocation3], 16
    $region13: #{_tinynet_forward_impl.1} parent=1 // pred_fallthru
      _
    %23 = sfence
    %v24 = vld [vmem:[%s1] sm:$0xff]
    %s25 = scalar_lea.vmem %s1, 8
    %v26 = vld [vmem:[%s25] sm:$0xff]
    %s27 = sld [smem:[#allocation2]]
    %v28 = vstv %s27
    %v29 = vmul.f32 %v28, %v24
    %s30 = sld [smem:[#allocation2 + $0x1]]
    %v31 = vstv %s30
    %v32 = vmul.f32 %v31, %v26
    %v33 = vadd.f32 %v29, %v32
    %s34 = sld [smem:[#allocation2 + $0x10]]
    %v35 = vstv %s34
    %v36 = vadd.f32 %v33, %v35
    %v37 = vxor.u32 %v36, 2147483648
    %v38 = vmul.f32 %v37, 1.442695
    %v39 = vpow.pop %v38
    %v40 = vadd.f32 %v39, 1.0
    %v41 = vrcp.pop %v40
    %v42 = vmul.f32 1.0, %v41
    %s43 = sld [smem:[#allocation2 + $0x18]]
    %v44 = vstv %s43
    %v45 = vmul.f32 %v44, %v42
    %v46 = vadd.f32 %v45, 0.0
    %s47 = sld [smem:[#allocation2 + $0x20]]
    %v48 = vstv %s47
    %v49 = vmul.f32 %v48, %v42
    %v50 = vadd.f32 %v49, 0.0
    %s51 = sld [smem:[#allocation2 + $0x2]]
    %v52 = vstv %s51
    %v53 = vmul.f32 %v52, %v24
    %s54 = sld [smem:[#allocation2 + $0x3]]
    %v55 = vstv %s54
    %v56 = vmul.f32 %v55, %v26
    %v57 = vadd.f32 %v53, %v56
    %s58 = sld [smem:[#allocation2 + $0x11]]
    %v59 = vstv %s58
    %v60 = vadd.f32 %v57, %v59
    %v61 = vxor.u32 %v60, 2147483648
    %v62 = vmul.f32 %v61, 1.442695
    %v63 = vpow.pop %v62
    %v64 = vadd.f32 %v63, 1.0
    %v65 = vrcp.pop %v64
    %v66 = vmul.f32 1.0, %v65
    %s67 = sld [smem:[#allocation2 + $0x19]]
    %v68 = vstv %s67
    %v69 = vmul.f32 %v68, %v66
    %v70 = vadd.f32 %v46, %v69
    %s71 = sld [smem:[#allocation2 + $0x21]]
    %v72 = vstv %s71
    %v73 = vmul.f32 %v72, %v66
    %v74 = vadd.f32 %v50, %v73
    %s75 = sld [smem:[#allocation2 + $0x4]]
    %v76 = vstv %s75
    %v77 = vmul.f32 %v76, %v24
    %s78 = sld [smem:[#allocation2 + $0x5]]
    %v79 = vstv %s78
    %v80 = vmul.f32 %v79, %v26
    %v81 = vadd.f32 %v77, %v80
    %s82 = sld [smem:[#allocation2 + $0x12]]
    %v83 = vstv %s82
    %v84 = vadd.f32 %v81, %v83
    %v85 = vxor.u32 %v84, 2147483648
    %v86 = vmul.f32 %v85, 1.442695
    %v87 = vpow.pop %v86
    %v88 = vadd.f32 %v87, 1.0
    %v89 = vrcp.pop %v88
    %v90 = vmul.f32 1.0, %v89
    %s91 = sld [smem:[#allocation2 + $0x1a]]
    %v92 = vstv %s91
    %v93 = vmul.f32 %v92, %v90
    %v94 = vadd.f32 %v70, %v93
    %s95 = sld [smem:[#allocation2 + $0x22]]
    %v96 = vstv %s95
    %v97 = vmul.f32 %v96, %v90
    %v98 = vadd.f32 %v74, %v97
    %s99 = sld [smem:[#allocation2 + $0x6]]
    %v100 = vstv %s99
    %v101 = vmul.f32 %v100, %v24
    %s102 = sld [smem:[#allocation2 + $0x7]]
    %v103 = vstv %s102
    %v104 = vmul.f32 %v103, %v26
    %v105 = vadd.f32 %v101, %v104
    %s106 = sld [smem:[#allocation2 + $0x13]]
    %v107 = vstv %s106
    %v108 = vadd.f32 %v105, %v107
    %v109 = vxor.u32 %v108, 2147483648
    %v110 = vmul.f32 %v109, 1.442695
    %v111 = vpow.pop %v110
    %v112 = vadd.f32 %v111, 1.0
    %v113 = vrcp.pop %v112
    %v114 = vmul.f32 1.0, %v113
    %s115 = sld [smem:[#allocation2 + $0x1b]]
    %v116 = vstv %s115
    %v117 = vmul.f32 %v116, %v114
    %v118 = vadd.f32 %v94, %v117
    %s119 = sld [smem:[#allocation2 + $0x23]]
    %v120 = vstv %s119
    %v121 = vmul.f32 %v120, %v114
    %v122 = vadd.f32 %v98, %v121
    %s123 = sld [smem:[#allocation2 + $0x8]]
    %v124 = vstv %s123
    %v125 = vmul.f32 %v124, %v24
    %s126 = sld [smem:[#allocation2 + $0x9]]
    %v127 = vstv %s126
    %v128 = vmul.f32 %v127, %v26
    %v129 = vadd.f32 %v125, %v128
    %s130 = sld [smem:[#allocation2 + $0x14]]
    %v131 = vstv %s130
    %v132 = vadd.f32 %v129, %v131
    %v133 = vxor.u32 %v132, 2147483648
    %v134 = vmul.f32 %v133, 1.442695
    %v135 = vpow.pop %v134
    %v136 = vadd.f32 %v135, 1.0
    %v137 = vrcp.pop %v136
    %v138 = vmul.f32 1.0, %v137
    %s139 = sld [smem:[#allocation2 + $0x1c]]
    %v140 = vstv %s139
    %v141 = vmul.f32 %v140, %v138
    %v142 = vadd.f32 %v118, %v141
    %s143 = sld [smem:[#allocation2 + $0x24]]
    %v144 = vstv %s143
    %v145 = vmul.f32 %v144, %v138
    %v146 = vadd.f32 %v122, %v145
    %s147 = sld [smem:[#allocation2 + $0xa]]
    %v148 = vstv %s147
    %v149 = vmul.f32 %v148, %v24
    %s150 = sld [smem:[#allocation2 + $0xb]]
    %v151 = vstv %s150
    %v152 = vmul.f32 %v151, %v26
    %v153 = vadd.f32 %v149, %v152
    %s154 = sld [smem:[#allocation2 + $0x15]]
    %v155 = vstv %s154
    %v156 = vadd.f32 %v153, %v155
    %v157 = vxor.u32 %v156, 2147483648
    %v158 = vmul.f32 %v157, 1.442695
    %v159 = vpow.pop %v158
    %v160 = vadd.f32 %v159, 1.0
    %v161 = vrcp.pop %v160
    %v162 = vmul.f32 1.0, %v161
    %s163 = sld [smem:[#allocation2 + $0x1d]]
    %v164 = vstv %s163
    %v165 = vmul.f32 %v164, %v162
    %v166 = vadd.f32 %v142, %v165
    %s167 = sld [smem:[#allocation2 + $0x25]]
    %v168 = vstv %s167
    %v169 = vmul.f32 %v168, %v162
    %v170 = vadd.f32 %v146, %v169
    %s171 = sld [smem:[#allocation2 + $0xc]]
    %v172 = vstv %s171
    %v173 = vmul.f32 %v172, %v24
    %s174 = sld [smem:[#allocation2 + $0xd]]
    %v175 = vstv %s174
    %v176 = vmul.f32 %v175, %v26
    %v177 = vadd.f32 %v173, %v176
    %s178 = sld [smem:[#allocation2 + $0x16]]
    %v179 = vstv %s178
    %v180 = vadd.f32 %v177, %v179
    %v181 = vxor.u32 %v180, 2147483648
    %v182 = vmul.f32 %v181, 1.442695
    %v183 = vpow.pop %v182
    %v184 = vadd.f32 %v183, 1.0
    %v185 = vrcp.pop %v184
    %v186 = vmul.f32 1.0, %v185
    %s187 = sld [smem:[#allocation2 + $0x1e]]
    %v188 = vstv %s187
    %v189 = vmul.f32 %v188, %v186
    %v190 = vadd.f32 %v166, %v189
    %s191 = sld [smem:[#allocation2 + $0x26]]
    %v192 = vstv %s191
    %v193 = vmul.f32 %v192, %v186
    %v194 = vadd.f32 %v170, %v193
    %s195 = sld [smem:[#allocation2 + $0xe]]
    %v196 = vstv %s195
    %v197 = vmul.f32 %v196, %v24
    %s198 = sld [smem:[#allocation2 + $0xf]]
    %v199 = vstv %s198
    %v200 = vmul.f32 %v199, %v26
    %v201 = vadd.f32 %v197, %v200
    %s202 = sld [smem:[#allocation2 + $0x17]]
    %v203 = vstv %s202
    %v204 = vadd.f32 %v201, %v203
    %v205 = vxor.u32 %v204, 2147483648
    %v206 = vmul.f32 %v205, 1.442695
    %v207 = vpow.pop %v206
    %v208 = vadd.f32 %v207, 1.0
    %v209 = vrcp.pop %v208
    %v210 = vmul.f32 1.0, %v209
    %s211 = sld [smem:[#allocation2 + $0x1f]]
    %v212 = vstv %s211
    %v213 = vmul.f32 %v212, %v210
    %v214 = vadd.f32 %v190, %v213
    %s215 = sld [smem:[#allocation2 + $0x27]]
    %v216 = vstv %s215
    %v217 = vmul.f32 %v216, %v210
    %v218 = vadd.f32 %v194, %v217
    %s219 = sld [smem:[#allocation2 + $0x28]]
    %v220 = vstv %s219
    %v221 = vadd.f32 %v214, %v220
    %222 = vst [vmem:[%s2] sm:$0xff] %v221
    %s223 = sld [smem:[#allocation2 + $0x29]]
    %v224 = vstv %s223
    %v225 = vadd.f32 %v218, %v224
    %s226 = scalar_lea.vmem %s2, 8
    %227 = vst [vmem:[%s226] sm:$0xff] %v225
    // Predicated region
    $region14: #{_tinynet_forward_impl.1} parent=1 // pred_check
      _
    $region15: #{_tinynet_forward_impl.1} parent=1 // pred_check_branch
      %229 = sbr.rel (0) target = $region17
    $region16: #{_tinynet_forward_impl.1} parent=1 // pred_region
      _
    $region17: #{_tinynet_forward_impl.1} parent=1 // pred_fallthru
      _
    // Predicated region
    $region18: #{_tinynet_forward_impl.1} parent=1 // pred_check
      _
    $region19: #{_tinynet_forward_impl.1} parent=1 // pred_check_branch
      %231 = sbr.rel (0) target = $region21
    $region20: #{_tinynet_forward_impl.1} parent=1 // pred_region
      _
    $region21: #{_tinynet_forward_impl.1} parent=1 // pred_fallthru
      _
    %232 = vsyncpa [#allocation3], 1

</llo_original>
